<compile_context>
chip_gen: v7x
topology: tpu7x:2x2x1
jax: 0.10.0
libtpu: 0.0.40
codegen_flags: <defaults>
</compile_context>

<pallas_src>
import functools

import jax
import jax.numpy as jnp
import numpy as np
from jax import lax
from jax.experimental import pallas as pl
from jax.experimental.pallas import tpu as pltpu


def _cost_kernel(out_ref, tgt_ref, c_ref, *, cost_class, matmul_dtype):
    # out_ref: (BT, NQ, D)   tgt_ref: (BT, NT, D)   c_ref: (BT, NQ, NT)
    q = out_ref[...]
    t = tgt_ref[...]
    qf = q.astype(jnp.float32)
    tf = t.astype(jnp.float32)

    # torch.nn.functional.normalize(x, p=2, dim=-1) == x / max(||x||_2, 1e-12)
    # == x * rsqrt(max(sum(x^2), 1e-24)).
    inv_q = lax.rsqrt(jnp.maximum(jnp.sum(qf * qf, axis=-1, keepdims=True), 1e-24))
    inv_t = lax.rsqrt(jnp.maximum(jnp.sum(tf * tf, axis=-1, keepdims=True), 1e-24))

    # Fold cost_class into the query scale; keep MXU operands in the input dtype
    # (native bf16 MXU path when inputs are bf16) unless matmul_dtype overrides.
    mm_dtype = q.dtype if matmul_dtype is None else matmul_dtype
    qn = (qf * (cost_class * inv_q)).astype(mm_dtype)
    tn = (tf * inv_t).astype(mm_dtype)

    # Batched matmul contracting the (last) feature dim of both operands:
    # 'bqd,btd->bqt' -- no materialized transpose; accumulate in f32.
    c_ref[...] = lax.dot_general(
        qn,
        tn,
        dimension_numbers=(((2,), (2,)), ((0,), (0,))),
        preferred_element_type=jnp.float32,
    )


def _num_tensorcores_per_chip() -> int:
    """Best-effort TC-per-chip count (v5e/v6e: 1, v7x/v4 megacore: 2)."""
    try:
        info = pltpu.get_tpu_info()
        for attr in ("num_cores", "num_tensorcores", "tensorcore_count"):
            v = getattr(info, attr, None)
            if v is not None and int(v) > 0:
                return int(v)
    except Exception:
        pass
    try:
        kind = jax.devices()[0].device_kind.lower()
    except Exception:
        return 1
    return 2 if ("v7" in kind or "v4" in kind) else 1


def _vmem_capacity_bytes() -> int:
    try:
        cap = int(pltpu.get_tpu_info().vmem_capacity_bytes)
        if cap > 0:
            return cap
    except Exception:
        pass
    return 64 << 20  # conservative fallback: v7x physical VMEM


def _largest_divisor_leq(n: int, cap: int) -> int:
    cap = max(1, min(int(cap), int(n)))
    for d in range(cap, 0, -1):
        if n % d == 0:
            return d
    return 1


def hungarian_cost_matrix(
    outputs, targets, cost_class: float = 1.0, batch_tile=None, matmul_dtype=None
):
    """Pallas kernel: C = cost_class * normalize(outputs) @ normalize(targets)^T.

    outputs: [bs, num_queries, dim], targets: [bs, num_targets, dim]
    returns: [bs, num_queries, num_targets] float32
    """
    bs, nq, d = outputs.shape
    bs2, nt, d2 = targets.shape
    assert bs == bs2 and d == d2, "batch / feature dims must match"

    in_bytes = jnp.dtype(outputs.dtype).itemsize
    # Per-batch-element block bytes (inputs in their real dtype, f32 output).
    per_batch_bytes = nq * d * in_bytes + nt * d * in_bytes + nq * nt * 4

    vmem_cap = _vmem_capacity_bytes()
    n_tc = _num_tensorcores_per_chip()

    if batch_tile is None:
        # Target ~24 MiB of double-buffered blocks per step (fewer grid steps ->
        # the ~0.35us fixed step overhead amortizes and DMA stays near roofline),
        # but never more than half the chip's VMEM minus headroom.
        budget = min(24 << 20, max(4 << 20, vmem_cap // 2 - (4 << 20)))
        bt_budget = max(1, budget // max(1, 2 * per_batch_bytes))
        # Keep >= n_tc grid steps only when the chip actually has >1 TensorCore,
        # so the "parallel" batch axis can shard across cores; on single-TC
        # v5e/v6e the largest tile wins.
        if n_tc > 1 and bs >= n_tc:
            bt_budget = min(bt_budget, max(1, bs // n_tc))
        bt = _largest_divisor_leq(bs, bt_budget)
    else:
        bt = _largest_divisor_leq(bs, int(batch_tile))

    working_set = 2 * bt * per_batch_bytes  # double-buffered blocks
    vmem_limit = int(
        min(max(32 << 20, working_set + (8 << 20)), max(16 << 20, vmem_cap - (4 << 20)))
    )

    kernel = functools.partial(
        _cost_kernel, cost_class=float(cost_class), matmul_dtype=matmul_dtype
    )
    # Block last-two dims equal the true array dims -> legal for any nq/nt/d,
    # no input padding / extra HBM traffic; grid only tiles the batch axis.
    c = pl.pallas_call(
        kernel,
        out_shape=jax.ShapeDtypeStruct((bs, nq, nt), jnp.float32),
        grid=(bs // bt,),
        in_specs=[
            pl.BlockSpec((bt, nq, d), lambda b: (b, 0, 0)),
            pl.BlockSpec((bt, nt, d), lambda b: (b, 0, 0)),
        ],
        out_specs=pl.BlockSpec((bt, nq, nt), lambda b: (b, 0, 0)),
        compiler_params=pltpu.CompilerParams(
            dimension_semantics=("parallel",),
            vmem_limit_bytes=vmem_limit,
        ),
    )(outputs, targets)
    return c


def hungarian_matcher_forward(outputs, targets, cost_class: float = 1.0):
    """Full forward: Pallas cost matrix + host-side Hungarian assignment.

    Returns (C, indices) where indices is a list (len = bs) of
    (index_i, index_j) int64 numpy arrays, matching the PyTorch module.
    """
    C = hungarian_cost_matrix(outputs, targets, cost_class)
    C_host = np.asarray(jax.device_get(C))

    try:
        from scipy.optimize import linear_sum_assignment
    except ImportError:
        # TODO(synk): linear_sum_assignment (Hungarian algorithm) has no Pallas
        # equivalent and scipy is unavailable; returning cost matrix only.
        return C, None

    indices = []
    for c in C_host:
        # Same convention as the PyTorch module: minimize +cost_class*cosine_sim.
        row_ind, col_ind = linear_sum_assignment(c)
        indices.append(
            (np.asarray(row_ind, dtype=np.int64), np.asarray(col_ind, dtype=np.int64))
        )
    return C, indices


if __name__ == "__main__":
    # Small shapes consistent with the module: bs=2, num_queries=8,
    # num_targets=8 (square so the assignment is total), feature dim=32.
    bs, nq, nt, d = 2, 8, 8, 32
    key = jax.random.PRNGKey(0)
    k1, k2 = jax.random.split(key)
    outputs = jax.random.normal(k1, (bs, nq, d), dtype=jnp.float32)
    targets = jax.random.normal(k2, (bs, nt, d), dtype=jnp.float32)

    C, matches = hungarian_matcher_forward(outputs, targets, cost_class=1.0)
    C = jax.block_until_ready(C)

    # Reference check of the Pallas-computed cost matrix against plain JAX.
    def _norm(x):
        n = jnp.sqrt(jnp.sum(x * x, axis=-1, keepdims=True))
        return x / jnp.maximum(n, 1e-12)

    C_ref = jnp.einsum("bqd,btd->bqt", _norm(outputs), _norm(targets))
    np.testing.assert_allclose(np.asarray(C), np.asarray(C_ref), rtol=1e-5, atol=1e-5)

    print("KERNEL_OK")
</pallas_src>

<mosaic_0001>
module attributes {stable_mosaic.version = 11 : i64} {
  func.func @_cost_kernel(%arg0: i32, %arg1: memref<2x8x32xf32, #tpu.memory_space<vmem>>, %arg2: memref<2x8x32xf32, #tpu.memory_space<vmem>>, %arg3: memref<2x8x8xf32, #tpu.memory_space<vmem>>) attributes {dimension_semantics = [#tpu.dimension_semantics<parallel>], iteration_bounds = array<i64: 1>, scalar_prefetch = 0 : i64, scratch_operands = 0 : i64, tpu.core_type = #tpu.core_type<tc>, window_params = [{transform_indices = @transform_0, window_bounds = array<i64: 2, 8, 32>}, {transform_indices = @transform_1, window_bounds = array<i64: 2, 8, 32>}, {transform_indices = @transform_2, window_bounds = array<i64: 2, 8, 8>}]} {
    %c0 = arith.constant 0 : index
    %c0_0 = arith.constant 0 : index
    %c0_1 = arith.constant 0 : index
    %0 = vector.load %arg1[%c0, %c0_0, %c0_1] : memref<2x8x32xf32, #tpu.memory_space<vmem>>, vector<2x8x32xf32>
    %c0_2 = arith.constant 0 : index
    %c0_3 = arith.constant 0 : index
    %c0_4 = arith.constant 0 : index
    %1 = vector.load %arg2[%c0_2, %c0_3, %c0_4] : memref<2x8x32xf32, #tpu.memory_space<vmem>>, vector<2x8x32xf32>
    %2 = arith.mulf %0, %0 : vector<2x8x32xf32>
    %cst = arith.constant dense<0.000000e+00> : vector<2x8xf32>
    %3 = vector.multi_reduction <add>, %2, %cst [2] : vector<2x8x32xf32> to vector<2x8xf32>
    %4 = vector.shape_cast %3 : vector<2x8xf32> to vector<2x8x1xf32>
    %cst_5 = arith.constant 1.000000e-24 : f32
    %5 = vector.broadcast %cst_5 : f32 to vector<2x8x1xf32>
    %6 = arith.maximumf %4, %5 : vector<2x8x1xf32>
    %7 = math.rsqrt %6 : vector<2x8x1xf32>
    %8 = arith.mulf %1, %1 : vector<2x8x32xf32>
    %cst_6 = arith.constant dense<0.000000e+00> : vector<2x8xf32>
    %9 = vector.multi_reduction <add>, %8, %cst_6 [2] : vector<2x8x32xf32> to vector<2x8xf32>
    %10 = vector.shape_cast %9 : vector<2x8xf32> to vector<2x8x1xf32>
    %cst_7 = arith.constant 1.000000e-24 : f32
    %11 = vector.broadcast %cst_7 : f32 to vector<2x8x1xf32>
    %12 = arith.maximumf %10, %11 : vector<2x8x1xf32>
    %13 = math.rsqrt %12 : vector<2x8x1xf32>
    %cst_8 = arith.constant 1.000000e+00 : f32
    %14 = vector.broadcast %cst_8 : f32 to vector<2x8x1xf32>
    %15 = arith.mulf %14, %7 : vector<2x8x1xf32>
    %16 = vector.broadcast %15 : vector<2x8x1xf32> to vector<2x8x32xf32>
    %17 = arith.mulf %0, %16 : vector<2x8x32xf32>
    %18 = vector.broadcast %13 : vector<2x8x1xf32> to vector<2x8x32xf32>
    %19 = arith.mulf %1, %18 : vector<2x8x32xf32>
    %cst_9 = arith.constant dense<0.000000e+00> : vector<2x8x8xf32>
    %20 = tpu.matmul %17, %19, %cst_9 {dimension_numbers = #tpu.dot_dimension_numbers<[2], [2], [1], [1], [0, 0, 0, 1, 1, 1], [0], [0]>} : vector<2x8x32xf32>, vector<2x8x32xf32>, vector<2x8x8xf32> -> vector<2x8x8xf32>
    %c0_10 = arith.constant 0 : index
    %c0_11 = arith.constant 0 : index
    %c0_12 = arith.constant 0 : index
    %21 = vector.load %arg3[%c0_10, %c0_11, %c0_12] : memref<2x8x8xf32, #tpu.memory_space<vmem>>, vector<2x8x8xf32>
    tpu.vector_store %arg3[%c0_10, %c0_11, %c0_12], %20 {strides = array<i32>} : memref<2x8x8xf32, #tpu.memory_space<vmem>>, vector<2x8x8xf32>,
    return
  }
  func.func @transform_0(%arg0: i32) -> (i32, i32, i32) {
    %c0_i32 = arith.constant 0 : i32
    %c0_i32_0 = arith.constant 0 : i32
    %c0_i32_1 = arith.constant 0 : i32
    return %arg0, %c0_i32, %c0_i32_0 : i32, i32, i32
  }
  func.func @transform_1(%arg0: i32) -> (i32, i32, i32) {
    %c0_i32 = arith.constant 0 : i32
    %c0_i32_0 = arith.constant 0 : i32
    %c0_i32_1 = arith.constant 0 : i32
    return %arg0, %c0_i32, %c0_i32_0 : i32, i32, i32
  }
  func.func @transform_2(%arg0: i32) -> (i32, i32, i32) {
    %c0_i32 = arith.constant 0 : i32
    %c0_i32_0 = arith.constant 0 : i32
    %c0_i32_1 = arith.constant 0 : i32
    return %arg0, %c0_i32, %c0_i32_0 : i32, i32, i32
  }
}

</mosaic_0001>

<llo_original>
// kernel: tpu_custom_call.1
$region0: #{tpu_custom_call.1}
  #allocation0 [shape = 'u32[]', space=smem, size = 0x4, offset = 0x4, fixed_abs, tag = 'smem constant byte address 0x4 - core index']
  #allocation1 [shape = 'u32[144,128]{1,0:T(1,128)}', space=vmem, size = 0x12000, scoped, tag = 'internal scratch']
  %s0 = inlined_call_operand.hbm [shape: f32[2,8,32], index: 0, kind: input, shape index: {}]
  %s1 = inlined_call_operand.hbm [shape: f32[2,8,32], index: 1, kind: input, shape index: {}]
  %s2 = inlined_call_operand.hbm [shape: f32[2,8,8], index: 2, kind: output, shape index: {}]
  %s3 = sld [smem:[#allocation0]]
  $region26: #{tpu_custom_call.1} parent=0
    _
  %s5 = ssub.s32 1, %s3
  %s6 = scalar_select 0, %s5, %s3
  $region1: #{tpu_custom_call.1} parent=0
    #allocation2 [shape = 'u8[8192]{0}', space=vmem, size = 0x2000, scoped, tag = 'input window, operand 0, single buffered']
    #allocation3 [shape = 's32[1]{0}', space=sflag, size = 0x4, scoped, tag = 'scoped memory for tpu_custom_call.1']
    #allocation4 [shape = 's32[1]{0}', space=sflag, size = 0x4, scoped, tag = 'scoped memory for tpu_custom_call.1']
    #allocation5 [shape = 'u8[8192]{0}', space=vmem, size = 0x2000, scoped, tag = 'input window, operand 1, single buffered']
    #allocation6 [shape = 's32[1]{0}', space=sflag, size = 0x4, scoped, tag = 'scoped memory for tpu_custom_call.1']
    #allocation7 [shape = 'u8[8192]{0}', space=vmem, size = 0x2000, scoped, tag = 'output window, operand 0, single buffered']
    %7 = vsyncpa [#allocation3], 0
    %8 = vsyncpa [#allocation6], 0
    %9 = vsyncpa [#allocation4], 0
    // Predicated region
    $region2: #{tpu_custom_call.1} parent=1 // pred_check
      _
    $region3: #{tpu_custom_call.1} parent=1 // pred_check_branch
      %11 = sbr.rel (0) target = $region5
    $region4: #{tpu_custom_call.1} parent=1 // pred_region
      %s13 = ssub.s32 256, 256
      %14 = vsyncadd [#allocation3], %s13
      %s15 = sshll.u32 [#allocation2], 4
      %s16 = int_to_ptr.vmem [resolvable:$true] %s15
      %21 = dma.hbm_to_vmem [thread:$0]  %s0, 256, %s16, [#allocation3], 128, 128, 8
    $region5: #{tpu_custom_call.1} parent=1 // pred_fallthru
      _
    // Predicated region
    $region6: #{tpu_custom_call.1} parent=1 // pred_check
      _
    $region7: #{tpu_custom_call.1} parent=1 // pred_check_branch
      %23 = sbr.rel (0) target = $region9
    $region8: #{tpu_custom_call.1} parent=1 // pred_region
      %s25 = ssub.s32 256, 256
      %26 = vsyncadd [#allocation6], %s25
      %s27 = sshll.u32 [#allocation5], 4
      %s28 = int_to_ptr.vmem [resolvable:$true] %s27
      %33 = dma.hbm_to_vmem [thread:$0]  %s1, 256, %s28, [#allocation6], 128, 128, 8
    $region9: #{tpu_custom_call.1} parent=1 // pred_fallthru
      _
    // Predicated region
    $region10: #{tpu_custom_call.1} parent=1 // pred_check
      _
    $region11: #{tpu_custom_call.1} parent=1 // pred_check_branch
      %35 = sbr.rel (0) target = $region13
    $region12: #{tpu_custom_call.1} parent=1 // pred_region
      %36 = dma.done [#allocation3], 256
    $region13: #{tpu_custom_call.1} parent=1 // pred_fallthru
      _
    // Predicated region
    $region14: #{tpu_custom_call.1} parent=1 // pred_check
      _
    $region15: #{tpu_custom_call.1} parent=1 // pred_check_branch
      %38 = sbr.rel (0) target = $region17
    $region16: #{tpu_custom_call.1} parent=1 // pred_region
      %39 = dma.done [#allocation6], 256
    $region17: #{tpu_custom_call.1} parent=1 // pred_fallthru
      _
    %v40 = vld [vmem:[#allocation2] sm:$0xff]
    %v41 = vld [vmem:[#allocation2 + $0x8] sm:$0xff]
    %v42 = vld [vmem:[#allocation5] sm:$0xff]
    %v43 = vld [vmem:[#allocation5 + $0x8] sm:$0xff]
    %v44 = vmul.f32 %v40, %v40
    %v45 = vmul.f32 %v41, %v41
    %vm46 = vcmask 261120
    %v47 = vsel %vm46, %v44, 0.0
    %48 = vadd.xlane.f32.xlu0 %v47
    %v49 = vpop.xlane.xlu0 %48
    %v50 = vsel %vm46, %v45, 0.0
    %51 = vadd.xlane.f32.xlu0 %v50
    %v52 = vpop.xlane.xlu0 %51
    %v53 = vmax.f32 %v49, 1e-24
    %v54 = vmax.f32 %v52, 1e-24
    %v55 = vrsqrt.pop %v53
    %v56 = vrsqrt.pop %v54
    %v57 = vmul.f32 %v42, %v42
    %v58 = vmul.f32 %v43, %v43
    %v59 = vsel %vm46, %v57, 0.0
    %60 = vadd.xlane.f32.xlu0 %v59
    %v61 = vpop.xlane.xlu0 %60
    %v62 = vsel %vm46, %v58, 0.0
    %63 = vadd.xlane.f32.xlu0 %v62
    %v64 = vpop.xlane.xlu0 %63
    %v65 = vmax.f32 %v61, 1e-24
    %v66 = vmax.f32 %v64, 1e-24
    %v67 = vrsqrt.pop %v65
    %v68 = vrsqrt.pop %v66
    %v69 = vmul.f32 %v40, %v55
    %v70 = vmul.f32 %v41, %v56
    %v71 = vmul.f32 %v42, %v67
    %v72 = vmul.f32 %v43, %v68
    %v74 = vsel %vm46, %v69, 0
    %v77 = vsel %vm46, %v71, 0
    %79 = vmatprep.subr.mxu0 0.0
    %80 = vmatpush1.xpose.msra.mxu0 %v77
    %81 = vmatprep.subr.mxu0 0.0
    %82 = vmatpush1.xpose.msra.mxu0 0.0
    %83 = vmatprep.subr.mxu0 0.0
    %84 = vmatpush1.xpose.msra.mxu0 0.0
    %85 = vmatprep.subr.mxu0 0.0
    %86 = vmatpush1.xpose.msra.mxu0 0.0
    %87 = vmatprep.subr.mxu0 0.0
    %88 = vmatpush1.xpose.msra.mxu0 0.0
    %89 = vmatprep.subr.mxu0 0.0
    %90 = vmatpush1.xpose.msra.mxu0 0.0
    %91 = vmatprep.subr.mxu0 0.0
    %92 = vmatpush1.xpose.msra.mxu0 0.0
    %93 = vmatprep.subr.mxu0 0.0
    %94 = vmatpush1.xpose.msra.mxu0 0.0
    %95 = vmatprep.subr.mxu0 0.0
    %96 = vmatpush1.xpose.msra.mxu0 0.0
    %97 = vmatprep.subr.mxu0 0.0
    %98 = vmatpush1.xpose.msra.mxu0 0.0
    %99 = vmatprep.subr.mxu0 0.0
    %100 = vmatpush1.xpose.msra.mxu0 0.0
    %101 = vmatprep.subr.mxu0 0.0
    %102 = vmatpush1.xpose.msra.mxu0 0.0
    %103 = vmatprep.subr.mxu0 0.0
    %104 = vmatpush1.xpose.msra.mxu0 0.0
    %105 = vmatprep.subr.mxu0 0.0
    %106 = vmatpush1.xpose.msra.mxu0 0.0
    %107 = vmatprep.subr.mxu0 0.0
    %108 = vmatpush1.xpose.msra.mxu0 0.0
    %109 = vmatprep.subr.mxu0 0.0
    %110 = vmatpush1.xpose.msra.mxu0 0.0
    %111 = vmatprep.subr.mxu0 0.0
    %112 = vmatpush1.xpose.msra.mxu0 0.0
    %113 = vmatprep.subr.mxu0 0.0
    %114 = vmatpush1.xpose.msra.mxu0 0.0
    %115 = vmatprep.subr.mxu0 0.0
    %116 = vmatpush1.xpose.msra.mxu0 0.0
    %117 = vmatprep.subr.mxu0 0.0
    %118 = vmatpush1.xpose.msra.mxu0 0.0
    %119 = vmatprep.subr.mxu0 0.0
    %120 = vmatpush1.xpose.msra.mxu0 0.0
    %121 = vmatprep.subr.mxu0 0.0
    %122 = vmatpush1.xpose.msra.mxu0 0.0
    %123 = vmatprep.subr.mxu0 0.0
    %124 = vmatpush1.xpose.msra.mxu0 0.0
    %125 = vmatprep.subr.mxu0 0.0
    %126 = vmatpush1.xpose.msra.mxu0 0.0
    %127 = vmatprep.subr.mxu0 0.0
    %128 = vmatpush1.xpose.msra.mxu0 0.0
    %129 = vmatprep.subr.mxu0 0.0
    %130 = vmatpush1.xpose.msra.mxu0 0.0
    %131 = vmatprep.subr.mxu0 0.0
    %132 = vmatpush1.xpose.msra.mxu0 0.0
    %133 = vmatprep.subr.mxu0 0.0
    %134 = vmatpush1.xpose.msra.mxu0 0.0
    %135 = vmatprep.subr.mxu0 0.0
    %136 = vmatpush1.xpose.msra.mxu0 0.0
    %137 = vmatprep.subr.mxu0 0.0
    %138 = vmatpush1.xpose.msra.mxu0 0.0
    %139 = vmatprep.subr.mxu0 0.0
    %140 = vmatpush1.xpose.msra.mxu0 0.0
    %141 = vmatprep.subr.mxu0 0.0
    %142 = vmatpush1.xpose.msra.mxu0 0.0
    %143 = vmatprep.mubr.f32.mxu0 0.0
    %144 = vmatmul.mubr.f32.gmra.mrb[0].mxu0 %v74
    %v145 = vpop.f32.mrb[0].mxu0
    %v146 = vadd.f32 0.0, %v145
    %v147 = vpop.f32.mrb[0].mxu0
    %148 = vdwg.mxu0
    %v150 = vsel %vm46, %v70, 0
    %v153 = vsel %vm46, %v72, 0
    %155 = vmatprep.subr.mxu0 0.0
    %156 = vmatpush1.xpose.msra.mxu0 %v153
    %157 = vmatprep.subr.mxu0 0.0
    %158 = vmatpush1.xpose.msra.mxu0 0.0
    %159 = vmatprep.subr.mxu0 0.0
    %160 = vmatpush1.xpose.msra.mxu0 0.0
    %161 = vmatprep.subr.mxu0 0.0
    %162 = vmatpush1.xpose.msra.mxu0 0.0
    %163 = vmatprep.subr.mxu0 0.0
    %164 = vmatpush1.xpose.msra.mxu0 0.0
    %165 = vmatprep.subr.mxu0 0.0
    %166 = vmatpush1.xpose.msra.mxu0 0.0
    %167 = vmatprep.subr.mxu0 0.0
    %168 = vmatpush1.xpose.msra.mxu0 0.0
    %169 = vmatprep.subr.mxu0 0.0
    %170 = vmatpush1.xpose.msra.mxu0 0.0
    %171 = vmatprep.subr.mxu0 0.0
    %172 = vmatpush1.xpose.msra.mxu0 0.0
    %173 = vmatprep.subr.mxu0 0.0
    %174 = vmatpush1.xpose.msra.mxu0 0.0
    %175 = vmatprep.subr.mxu0 0.0
    %176 = vmatpush1.xpose.msra.mxu0 0.0
    %177 = vmatprep.subr.mxu0 0.0
    %178 = vmatpush1.xpose.msra.mxu0 0.0
    %179 = vmatprep.subr.mxu0 0.0
    %180 = vmatpush1.xpose.msra.mxu0 0.0
    %181 = vmatprep.subr.mxu0 0.0
    %182 = vmatpush1.xpose.msra.mxu0 0.0
    %183 = vmatprep.subr.mxu0 0.0
    %184 = vmatpush1.xpose.msra.mxu0 0.0
    %185 = vmatprep.subr.mxu0 0.0
    %186 = vmatpush1.xpose.msra.mxu0 0.0
    %187 = vmatprep.subr.mxu0 0.0
    %188 = vmatpush1.xpose.msra.mxu0 0.0
    %189 = vmatprep.subr.mxu0 0.0
    %190 = vmatpush1.xpose.msra.mxu0 0.0
    %191 = vmatprep.subr.mxu0 0.0
    %192 = vmatpush1.xpose.msra.mxu0 0.0
    %193 = vmatprep.subr.mxu0 0.0
    %194 = vmatpush1.xpose.msra.mxu0 0.0
    %195 = vmatprep.subr.mxu0 0.0
    %196 = vmatpush1.xpose.msra.mxu0 0.0
    %197 = vmatprep.subr.mxu0 0.0
    %198 = vmatpush1.xpose.msra.mxu0 0.0
    %199 = vmatprep.subr.mxu0 0.0
    %200 = vmatpush1.xpose.msra.mxu0 0.0
    %201 = vmatprep.subr.mxu0 0.0
    %202 = vmatpush1.xpose.msra.mxu0 0.0
    %203 = vmatprep.subr.mxu0 0.0
    %204 = vmatpush1.xpose.msra.mxu0 0.0
    %205 = vmatprep.subr.mxu0 0.0
    %206 = vmatpush1.xpose.msra.mxu0 0.0
    %207 = vmatprep.subr.mxu0 0.0
    %208 = vmatpush1.xpose.msra.mxu0 0.0
    %209 = vmatprep.subr.mxu0 0.0
    %210 = vmatpush1.xpose.msra.mxu0 0.0
    %211 = vmatprep.subr.mxu0 0.0
    %212 = vmatpush1.xpose.msra.mxu0 0.0
    %213 = vmatprep.subr.mxu0 0.0
    %214 = vmatpush1.xpose.msra.mxu0 0.0
    %215 = vmatprep.subr.mxu0 0.0
    %216 = vmatpush1.xpose.msra.mxu0 0.0
    %217 = vmatprep.subr.mxu0 0.0
    %218 = vmatpush1.xpose.msra.mxu0 0.0
    %219 = vmatprep.mubr.f32.mxu0 0.0
    %220 = vmatmul.mubr.f32.gmra.mrb[0].mxu0 %v150
    %v221 = vpop.f32.mrb[0].mxu0
    %v222 = vadd.f32 0.0, %v221
    %v223 = vpop.f32.mrb[0].mxu0
    %224 = vdwg.mxu0
    %vm225 = vcmask 64512
    %226 = vst.msk [vmem:[#allocation7] sm:$0xff] %vm225, %v146
    %227 = vst.msk [vmem:[#allocation7 + $0x8] sm:$0xff] %vm225, %v222
    // Predicated region
    $region18: #{tpu_custom_call.1} parent=1 // pred_check
      _
    $region19: #{tpu_custom_call.1} parent=1 // pred_check_branch
      %229 = sbr.rel (0) target = $region21
    $region20: #{tpu_custom_call.1} parent=1 // pred_region
      %s231 = ssub.s32 256, 256
      %232 = vsyncadd [#allocation4], %s231
      %s233 = sshll.u32 [#allocation7], 4
      %s234 = int_to_ptr.vmem [resolvable:$true] %s233
      %239 = dma.vmem_to_hbm [thread:$0]  %s234, 256, %s2, [#allocation4], 128, 128, 8
    $region21: #{tpu_custom_call.1} parent=1 // pred_fallthru
      _
    // Predicated region
    $region22: #{tpu_custom_call.1} parent=1 // pred_check
      _
    $region23: #{tpu_custom_call.1} parent=1 // pred_check_branch
      %241 = sbr.rel (0) target = $region25
    $region24: #{tpu_custom_call.1} parent=1 // pred_region
      %242 = dma.done [#allocation4], 256
    $region25: #{tpu_custom_call.1} parent=1 // pred_fallthru
      _
    %243 = vsyncpa [#allocation3], 1
    %244 = vsyncpa [#allocation6], 1
    %245 = vsyncpa [#allocation4], 1

</llo_original>
